<compile_context>
chip_gen: v7x
topology: tpu7x:2x2x1
jax: 0.10.0
libtpu: 0.0.40
codegen_flags: <defaults>
</compile_context>

<pallas_src>
import jax
import jax.numpy as jnp
from jax import lax
from jax.experimental import pallas as pl
from jax.experimental.pallas import tpu as pltpu

LANE = 128      # lane width (last-dim alignment)
SUBLANE = 8     # sublane width (second-to-last-dim alignment)


def _round_up(x, m):
    return (x + m - 1) // m * m


def _pick_batch_tile(bp):
    """Prefer ~256-512 row tiles and >=2 tiles (v7x has 2 TensorCores)."""
    for tb in (512, 256, 128, 64, 32, 16, 8):
        if tb <= bp and bp % tb == 0 and bp // tb >= 2:
            return tb
    return bp  # tiny batch: single tile


# ----------------------------------------------------------------------------
# Fused MLP kernel: one grid step == ALL layers applied to one batch tile.
# ----------------------------------------------------------------------------
def _fused_mlp_kernel(x_ref, w_ref, b_ref, o_ref):
    num_layers = w_ref.shape[0]          # static at trace time

    act0 = x_ref[...]                    # bf16 [tb, Dp]

    def hidden_layer(l, act):
        # MXU matmul: bf16 inputs, f32 accumulation.  Epilogue stays in f32.
        y = jnp.dot(act, w_ref[l], preferred_element_type=jnp.float32)
        y = y + b_ref[l]                 # [1, Dp] bias broadcast over the tile
        return jnp.maximum(y, 0.0).astype(jnp.bfloat16)

    # Hidden layers (Linear + ReLU), fully unrolled so LLO sees the whole chain.
    act = lax.fori_loop(0, num_layers - 1, hidden_layer, act0, unroll=True)

    # Final layer: no ReLU, no activation write-back — store the output only.
    y = jnp.dot(act, w_ref[num_layers - 1], preferred_element_type=jnp.float32)
    y = y + b_ref[num_layers - 1]
    o_ref[...] = y.astype(o_ref.dtype)


# ----------------------------------------------------------------------------
# Parameter packing: stack + zero-pad every layer to a common [Dp, Dp] tile.
# ----------------------------------------------------------------------------
def prepare_stacked_params(params, pad_dim):
    """params: list of (w [din, dout] f32, b [1, dout] f32) ->
    (w_stack [L, Dp, Dp] bf16, b_stack [L, 1, Dp] f32), zero-padded."""
    num_layers = len(params)
    w_stack = jnp.zeros((num_layers, pad_dim, pad_dim), jnp.bfloat16)
    b_stack = jnp.zeros((num_layers, 1, pad_dim), jnp.float32)
    for i, (w, b) in enumerate(params):
        din, dout = w.shape
        w_stack = w_stack.at[i, :din, :dout].set(w.astype(jnp.bfloat16))
        b_stack = b_stack.at[i, :, :dout].set(b.astype(jnp.float32))
    return w_stack, b_stack


# ----------------------------------------------------------------------------
# Wrapper: pad input, run the single fused pallas_call, slice the real output.
# ----------------------------------------------------------------------------
def fused_mlp_forward(x, w_stack, b_stack, output_size):
    batch, din = x.shape
    num_layers, pad_dim, _ = w_stack.shape

    bp = _round_up(max(batch, SUBLANE), SUBLANE)
    tb = _pick_batch_tile(bp)
    n_batch_tiles = bp // tb

    # bf16 input pad: halves the HBM->VMEM DMA vs f32 (kernel wants bf16 anyway).
    x_pad = (
        jnp.zeros((bp, pad_dim), jnp.bfloat16)
        .at[:batch, :din]
        .set(x.astype(jnp.bfloat16))
    )

    # VMEM-resident-weights path only; see TODO at top for the streamed/tiled
    # path needed once the weight stack no longer fits scoped VMEM.
    weight_bytes = w_stack.size * 2
    assert weight_bytes < 8 * 1024 * 1024, (
        "weight stack too large for the VMEM-resident fused path"
    )

    flops = 2 * bp * pad_dim * pad_dim * num_layers
    bytes_accessed = (
        x_pad.size * 2                                # bf16 activations in
        + w_stack.size * 2 * n_batch_tiles            # weights re-read per tile
        + b_stack.size * 4 * n_batch_tiles            # biases re-read per tile
        + bp * pad_dim * 4                            # f32 output
    )
    cost = pl.CostEstimate(
        flops=flops, transcendentals=0, bytes_accessed=bytes_accessed
    )

    out_pad = pl.pallas_call(
        _fused_mlp_kernel,
        out_shape=jax.ShapeDtypeStruct((bp, pad_dim), jnp.float32),
        grid_spec=pltpu.PrefetchScalarGridSpec(
            num_scalar_prefetch=0,
            grid=(n_batch_tiles,),
            in_specs=[
                # activations: one batch tile per grid step
                pl.BlockSpec((tb, pad_dim), lambda bi: (bi, 0)),
                # full weight stack, resident in VMEM (constant block index)
                pl.BlockSpec((num_layers, pad_dim, pad_dim), lambda bi: (0, 0, 0)),
                # full bias stack, resident in VMEM (constant block index)
                pl.BlockSpec((num_layers, 1, pad_dim), lambda bi: (0, 0, 0)),
            ],
            out_specs=pl.BlockSpec((tb, pad_dim), lambda bi: (bi, 0)),
        ),
        compiler_params=pltpu.CompilerParams(
            dimension_semantics=("parallel",),
        ),
        cost_estimate=cost,
    )(x_pad, w_stack, b_stack)

    return out_pad[:batch, :output_size]


# ----------------------------------------------------------------------------
# Init (matches nn.Linear default: U(-1/sqrt(fan_in), 1/sqrt(fan_in)))
# ----------------------------------------------------------------------------
def init_standard_model_params(key, input_size, hidden_size, output_size,
                               num_layers=2):
    dims = [input_size] + [hidden_size] * num_layers + [output_size]
    params = []
    for i in range(len(dims) - 1):
        fan_in, fan_out = dims[i], dims[i + 1]
        key, kw, kb = jax.random.split(key, 3)
        bound = 1.0 / jnp.sqrt(fan_in)
        w = jax.random.uniform(kw, (fan_in, fan_out), jnp.float32, -bound, bound)
        b = jax.random.uniform(kb, (1, fan_out), jnp.float32, -bound, bound)
        params.append((w, b))
    return params


def reference_forward(x, params):
    """Pure-JAX reference mirroring the kernel numerics (bf16 matmul, f32 acc)."""
    n = len(params)
    h = x.astype(jnp.bfloat16)
    for i, (w, b) in enumerate(params):
        y = jnp.dot(
            h, w.astype(jnp.bfloat16), preferred_element_type=jnp.float32
        ) + b
        h = jnp.maximum(y, 0.0).astype(jnp.bfloat16) if i < n - 1 else y
    return h


if __name__ == "__main__":
    input_size, hidden_size, output_size, num_layers = 32, 32, 16, 2
    batch = 8

    key = jax.random.PRNGKey(0)
    key, kx = jax.random.split(key)
    x = jax.random.normal(kx, (batch, input_size), jnp.float32)

    params = init_standard_model_params(
        key, input_size, hidden_size, output_size, num_layers
    )

    # Common padded feature dim for every layer (lane-dense, full MXU tile).
    pad_dim = _round_up(max(input_size, hidden_size, output_size), LANE)
    w_stack, b_stack = prepare_stacked_params(params, pad_dim)

    out = fused_mlp_forward(x, w_stack, b_stack, output_size)
    out = jax.block_until_ready(out)

    ref = reference_forward(x, params)
    assert out.shape == (batch, output_size)
    assert jnp.allclose(out, ref, atol=1e-2, rtol=1e-2)

    print("KERNEL_OK")
</pallas_src>

<mosaic_0001>
module attributes {stable_mosaic.version = 11 : i64} {
  func.func @_fused_mlp_kernel(%arg0: i32, %arg1: memref<8x128xbf16, #tpu.memory_space<vmem>>, %arg2: memref<3x128x128xbf16, #tpu.memory_space<vmem>>, %arg3: memref<3x1x128xf32, #tpu.memory_space<vmem>>, %arg4: memref<8x128xf32, #tpu.memory_space<vmem>>) attributes {dimension_semantics = [#tpu.dimension_semantics<parallel>], iteration_bounds = array<i64: 1>, scalar_prefetch = 0 : i64, scratch_operands = 0 : i64, tpu.core_type = #tpu.core_type<tc>, window_params = [{transform_indices = @transform_0, window_bounds = array<i64: 8, 128>}, {pipeline_mode = #tpu.pipeline_mode<synchronous>, transform_indices = @transform_1, window_bounds = array<i64: 3, 128, 128>}, {pipeline_mode = #tpu.pipeline_mode<synchronous>, transform_indices = @transform_2, window_bounds = array<i64: 3, 1, 128>}, {transform_indices = @transform_3, window_bounds = array<i64: 8, 128>}]} {
    %c0 = arith.constant 0 : index
    %c0_0 = arith.constant 0 : index
    %0 = vector.load %arg1[%c0, %c0_0] : memref<8x128xbf16, #tpu.memory_space<vmem>>, vector<8x128xbf16>
    %c0_i32 = arith.constant 0 : i32
    %1 = arith.index_cast %c0_i32 : i32 to index
    %c0_1 = arith.constant 0 : index
    %c0_2 = arith.constant 0 : index
    %2 = vector.load %arg2[%1, %c0_1, %c0_2] : memref<3x128x128xbf16, #tpu.memory_space<vmem>>, vector<1x128x128xbf16>
    %3 = vector.shape_cast %2 : vector<1x128x128xbf16> to vector<128x128xbf16>
    %cst = arith.constant dense<0.000000e+00> : vector<8x128xf32>
    %4 = tpu.matmul %0, %3, %cst {dimension_numbers = #tpu.dot_dimension_numbers<[1], [0], [0], [1], [0, 0, 1, 1], [], []>} : vector<8x128xbf16>, vector<128x128xbf16>, vector<8x128xf32> -> vector<8x128xf32>
    %5 = arith.index_cast %c0_i32 : i32 to index
    %c0_3 = arith.constant 0 : index
    %c0_4 = arith.constant 0 : index
    %6 = vector.load %arg3[%5, %c0_3, %c0_4] : memref<3x1x128xf32, #tpu.memory_space<vmem>>, vector<1x1x128xf32>
    %7 = vector.shape_cast %6 : vector<1x1x128xf32> to vector<1x128xf32>
    %8 = vector.broadcast %7 : vector<1x128xf32> to vector<8x128xf32>
    %9 = arith.addf %4, %8 : vector<8x128xf32>
    %cst_5 = arith.constant 0.000000e+00 : f32
    %10 = vector.broadcast %cst_5 : f32 to vector<8x128xf32>
    %11 = arith.maximumf %9, %10 : vector<8x128xf32>
    %12 = arith.truncf %11 : vector<8x128xf32> to vector<8x128xbf16>
    %c1_i32 = arith.constant 1 : i32
    %13 = arith.index_cast %c1_i32 : i32 to index
    %c0_6 = arith.constant 0 : index
    %c0_7 = arith.constant 0 : index
    %14 = vector.load %arg2[%13, %c0_6, %c0_7] : memref<3x128x128xbf16, #tpu.memory_space<vmem>>, vector<1x128x128xbf16>
    %15 = vector.shape_cast %14 : vector<1x128x128xbf16> to vector<128x128xbf16>
    %cst_8 = arith.constant dense<0.000000e+00> : vector<8x128xf32>
    %16 = tpu.matmul %12, %15, %cst_8 {dimension_numbers = #tpu.dot_dimension_numbers<[1], [0], [0], [1], [0, 0, 1, 1], [], []>} : vector<8x128xbf16>, vector<128x128xbf16>, vector<8x128xf32> -> vector<8x128xf32>
    %17 = arith.index_cast %c1_i32 : i32 to index
    %c0_9 = arith.constant 0 : index
    %c0_10 = arith.constant 0 : index
    %18 = vector.load %arg3[%17, %c0_9, %c0_10] : memref<3x1x128xf32, #tpu.memory_space<vmem>>, vector<1x1x128xf32>
    %19 = vector.shape_cast %18 : vector<1x1x128xf32> to vector<1x128xf32>
    %20 = vector.broadcast %19 : vector<1x128xf32> to vector<8x128xf32>
    %21 = arith.addf %16, %20 : vector<8x128xf32>
    %cst_11 = arith.constant 0.000000e+00 : f32
    %22 = vector.broadcast %cst_11 : f32 to vector<8x128xf32>
    %23 = arith.maximumf %21, %22 : vector<8x128xf32>
    %24 = arith.truncf %23 : vector<8x128xf32> to vector<8x128xbf16>
    %c2_i32 = arith.constant 2 : i32
    %c2 = arith.constant 2 : index
    %c0_12 = arith.constant 0 : index
    %c0_13 = arith.constant 0 : index
    %25 = vector.load %arg2[%c2, %c0_12, %c0_13] : memref<3x128x128xbf16, #tpu.memory_space<vmem>>, vector<1x128x128xbf16>
    %26 = vector.shape_cast %25 : vector<1x128x128xbf16> to vector<128x128xbf16>
    %cst_14 = arith.constant dense<0.000000e+00> : vector<8x128xf32>
    %27 = tpu.matmul %24, %26, %cst_14 {dimension_numbers = #tpu.dot_dimension_numbers<[1], [0], [0], [1], [0, 0, 1, 1], [], []>} : vector<8x128xbf16>, vector<128x128xbf16>, vector<8x128xf32> -> vector<8x128xf32>
    %c2_15 = arith.constant 2 : index
    %c0_16 = arith.constant 0 : index
    %c0_17 = arith.constant 0 : index
    %28 = vector.load %arg3[%c2_15, %c0_16, %c0_17] : memref<3x1x128xf32, #tpu.memory_space<vmem>>, vector<1x1x128xf32>
    %29 = vector.shape_cast %28 : vector<1x1x128xf32> to vector<1x128xf32>
    %30 = vector.broadcast %29 : vector<1x128xf32> to vector<8x128xf32>
    %31 = arith.addf %27, %30 : vector<8x128xf32>
    %c0_18 = arith.constant 0 : index
    %c0_19 = arith.constant 0 : index
    %32 = vector.load %arg4[%c0_18, %c0_19] : memref<8x128xf32, #tpu.memory_space<vmem>>, vector<8x128xf32>
    tpu.vector_store %arg4[%c0_18, %c0_19], %31 {strides = array<i32>} : memref<8x128xf32, #tpu.memory_space<vmem>>, vector<8x128xf32>,
    return
  }
  func.func @transform_0(%arg0: i32) -> (i32, i32) {
    %c0_i32 = arith.constant 0 : i32
    %c0_i32_0 = arith.constant 0 : i32
    return %arg0, %c0_i32 : i32, i32
  }
  func.func @transform_1(%arg0: i32) -> (i32, i32, i32) {
    %c0_i32 = arith.constant 0 : i32
    %c0_i32_0 = arith.constant 0 : i32
    %c0_i32_1 = arith.constant 0 : i32
    %c0_i32_2 = arith.constant 0 : i32
    return %c0_i32, %c0_i32_0, %c0_i32_1 : i32, i32, i32
  }
  func.func @transform_2(%arg0: i32) -> (i32, i32, i32) {
    %c0_i32 = arith.constant 0 : i32
    %c0_i32_0 = arith.constant 0 : i32
    %c0_i32_1 = arith.constant 0 : i32
    %c0_i32_2 = arith.constant 0 : i32
    return %c0_i32, %c0_i32_0, %c0_i32_1 : i32, i32, i32
  }
  func.func @transform_3(%arg0: i32) -> (i32, i32) {
    %c0_i32 = arith.constant 0 : i32
    %c0_i32_0 = arith.constant 0 : i32
    return %arg0, %c0_i32 : i32, i32
  }
}

</mosaic_0001>

<llo_original>
// kernel: tpu_custom_call.1
$region0: #{tpu_custom_call.1}
  #allocation0 [shape = 'u32[]', space=smem, size = 0x4, offset = 0x4, fixed_abs, tag = 'smem constant byte address 0x4 - core index']
  #allocation1 [shape = 'u32[144,128]{1,0:T(1,128)}', space=vmem, size = 0x12000, scoped, tag = 'internal scratch']
  %s0 = inlined_call_operand.hbm [shape: bf16[8,128], index: 0, kind: input, shape index: {}]
  %s1 = inlined_call_operand.hbm [shape: bf16[3,128,128], index: 1, kind: input, shape index: {}]
  %s2 = inlined_call_operand.vmem [shape: f32[3,1,128], index: 2, kind: input, shape index: {}]
  %s3 = inlined_call_operand.hbm [shape: f32[8,128], index: 3, kind: output, shape index: {}]
  %s4 = sld [smem:[#allocation0]]
  $region30: #{tpu_custom_call.1} parent=0
    _
  %s6 = ssub.s32 1, %s4
  %s7 = scalar_select 0, %s6, %s4
  $region1: #{tpu_custom_call.1} parent=0
    #allocation2 [shape = 'u8[2048]{0}', space=vmem, size = 0x800, scoped, tag = 'input window, operand 0, single buffered']
    #allocation3 [shape = 's32[1]{0}', space=sflag, size = 0x4, scoped, tag = 'scoped memory for tpu_custom_call.1']
    #allocation4 [shape = 's32[1]{0}', space=sflag, size = 0x4, scoped, tag = 'scoped memory for tpu_custom_call.1']
    #allocation5 [shape = 'u8[98304]{0}', space=vmem, size = 0x18000, scoped, tag = 'input window, operand 1, single buffered']
    #allocation6 [shape = 's32[1]{0}', space=sflag, size = 0x4, scoped, tag = 'scoped memory for tpu_custom_call.1']
    #allocation7 [shape = 'u8[4096]{0}', space=vmem, size = 0x1000, scoped, tag = 'output window, operand 0, single buffered']
    %8 = vsyncpa [#allocation3], 0
    %9 = vsyncpa [#allocation6], 0
    %10 = vsyncpa [#allocation4], 0
    // Predicated region
    $region2: #{tpu_custom_call.1} parent=1 // pred_check
      _
    $region3: #{tpu_custom_call.1} parent=1 // pred_check_branch
      %12 = sbr.rel (0) target = $region5
    $region4: #{tpu_custom_call.1} parent=1 // pred_region
      %s14 = ssub.s32 64, 64
      %15 = vsyncadd [#allocation3], %s14
      %s17 = sshll.u32 [#allocation2], 4
      %s18 = int_to_ptr.vmem [resolvable:$true] %s17
      %20 = dma.hbm_to_vmem [thread:$0]  %s0, 64, %s18, [#allocation3]
    $region5: #{tpu_custom_call.1} parent=1 // pred_fallthru
      _
    // Predicated region
    $region6: #{tpu_custom_call.1} parent=1 // pred_check
      _
    $region7: #{tpu_custom_call.1} parent=1 // pred_check_branch
      %22 = sbr.rel (0) target = $region9
    $region8: #{tpu_custom_call.1} parent=1 // pred_region
      %s24 = ssub.s32 3072, 3072
      %25 = vsyncadd [#allocation6], %s24
      %s26 = sshll.u32 [#allocation5], 4
      %s27 = int_to_ptr.vmem [resolvable:$true] %s26
      %32 = dma.hbm_to_vmem [thread:$0]  %s1, 3072, %s27, [#allocation6], 64, 64, 4
    $region9: #{tpu_custom_call.1} parent=1 // pred_fallthru
      _
    // Predicated region
    $region10: #{tpu_custom_call.1} parent=1 // pred_check
      _
    $region11: #{tpu_custom_call.1} parent=1 // pred_check_branch
      %34 = sbr.rel (0) target = $region13
    $region12: #{tpu_custom_call.1} parent=1 // pred_region
      _
    $region13: #{tpu_custom_call.1} parent=1 // pred_fallthru
      _
    // Predicated region
    $region14: #{tpu_custom_call.1} parent=1 // pred_check
      _
    $region15: #{tpu_custom_call.1} parent=1 // pred_check_branch
      %36 = sbr.rel (0) target = $region17
    $region16: #{tpu_custom_call.1} parent=1 // pred_region
      %37 = dma.done [#allocation3], 64
    $region17: #{tpu_custom_call.1} parent=1 // pred_fallthru
      _
    // Predicated region
    $region18: #{tpu_custom_call.1} parent=1 // pred_check
      _
    $region19: #{tpu_custom_call.1} parent=1 // pred_check_branch
      %39 = sbr.rel (0) target = $region21
    $region20: #{tpu_custom_call.1} parent=1 // pred_region
      %40 = dma.done [#allocation6], 3072
    $region21: #{tpu_custom_call.1} parent=1 // pred_fallthru
      _
    %v42 = vld [vmem:[#allocation2] sm:$0xf]
    %v43 = vld [vmem:[#allocation5] sm:$0xf]
    %v44 = vld [vmem:[#allocation5 + $0x4] sm:$0xf]
    %v45 = vld [vmem:[#allocation5 + $0x8] sm:$0xf]
    %v46 = vld [vmem:[#allocation5 + $0xc] sm:$0xf]
    %v47 = vld [vmem:[#allocation5 + $0x10] sm:$0xf]
    %v48 = vld [vmem:[#allocation5 + $0x14] sm:$0xf]
    %v49 = vld [vmem:[#allocation5 + $0x18] sm:$0xf]
    %v50 = vld [vmem:[#allocation5 + $0x1c] sm:$0xf]
    %v51 = vld [vmem:[#allocation5 + $0x20] sm:$0xf]
    %v52 = vld [vmem:[#allocation5 + $0x24] sm:$0xf]
    %v53 = vld [vmem:[#allocation5 + $0x28] sm:$0xf]
    %v54 = vld [vmem:[#allocation5 + $0x2c] sm:$0xf]
    %v55 = vld [vmem:[#allocation5 + $0x30] sm:$0xf]
    %v56 = vld [vmem:[#allocation5 + $0x34] sm:$0xf]
    %v57 = vld [vmem:[#allocation5 + $0x38] sm:$0xf]
    %v58 = vld [vmem:[#allocation5 + $0x3c] sm:$0xf]
    %v59 = vld [vmem:[%s2] sm:$0x1]
    %v61 = vlaneseq
    %v62 = vshrl.u32 %v61, 7
    %v63 = vsub.s32 0, %v62
    %v64 = vrot.slane %v59, %v63
    %v82 = vunpack.c.l.b16 %v43
    %v83 = vunpack.c.l.b16 %v44
    %v84 = vunpack.c.l.b16 %v45
    %v85 = vunpack.c.l.b16 %v46
    %v86 = vunpack.c.l.b16 %v47
    %v87 = vunpack.c.l.b16 %v48
    %v88 = vunpack.c.l.b16 %v49
    %v89 = vunpack.c.l.b16 %v50
    %v90 = vunpack.c.l.b16 %v51
    %v91 = vunpack.c.l.b16 %v52
    %v92 = vunpack.c.l.b16 %v53
    %v93 = vunpack.c.l.b16 %v54
    %v94 = vunpack.c.l.b16 %v55
    %v95 = vunpack.c.l.b16 %v56
    %v96 = vunpack.c.l.b16 %v57
    %v97 = vunpack.c.l.b16 %v58
    %v98 = vpack.c.b16 %v83, %v82
    %v99 = vpack.c.b16 %v85, %v84
    %v100 = vpack.c.b16 %v87, %v86
    %v101 = vpack.c.b16 %v89, %v88
    %v102 = vpack.c.b16 %v91, %v90
    %v103 = vpack.c.b16 %v93, %v92
    %v104 = vpack.c.b16 %v95, %v94
    %v105 = vpack.c.b16 %v97, %v96
    %114 = vmatprep.subr.bf16.mxu0 0
    %115 = vmatpush1.bf16.msra.mxu0 %v98
    %116 = vmatprep.subr.bf16.mxu0 0
    %117 = vmatpush1.bf16.msra.mxu0 %v99
    %118 = vmatprep.subr.bf16.mxu0 0
    %119 = vmatpush1.bf16.msra.mxu0 %v100
    %120 = vmatprep.subr.bf16.mxu0 0
    %121 = vmatpush1.bf16.msra.mxu0 %v101
    %122 = vmatprep.subr.bf16.mxu0 0
    %123 = vmatpush1.bf16.msra.mxu0 %v102
    %124 = vmatprep.subr.bf16.mxu0 0
    %125 = vmatpush1.bf16.msra.mxu0 %v103
    %126 = vmatprep.subr.bf16.mxu0 0
    %127 = vmatpush1.bf16.msra.mxu0 %v104
    %128 = vmatprep.subr.bf16.mxu0 0
    %129 = vmatpush1.bf16.msra.mxu0 %v105
    %130 = vmatprep.subr.bf16.mxu0 0
    %131 = vmatpush1.bf16.msra.mxu0 0
    %132 = vmatprep.subr.bf16.mxu0 0
    %133 = vmatpush1.bf16.msra.mxu0 0
    %134 = vmatprep.subr.bf16.mxu0 0
    %135 = vmatpush1.bf16.msra.mxu0 0
    %136 = vmatprep.subr.bf16.mxu0 0
    %137 = vmatpush1.bf16.msra.mxu0 0
    %138 = vmatprep.subr.bf16.mxu0 0
    %139 = vmatpush1.bf16.msra.mxu0 0
    %140 = vmatprep.subr.bf16.mxu0 0
    %141 = vmatpush1.bf16.msra.mxu0 0
    %142 = vmatprep.subr.bf16.mxu0 0
    %143 = vmatpush1.bf16.msra.mxu0 0
    %144 = vmatprep.subr.bf16.mxu0 0
    %145 = vmatpush1.bf16.msra.mxu0 0
    %146 = vmatprep.mubr.bf16.mxu0 0
    %147 = vmatmul.mubr.bf16.gmra.mrb[0].mxu0 %v42
    %v148 = vpop.f32.mrb[0].mxu0
    %v149 = vadd.f32 %v64, %v148
    %v150 = vpop.f32.mrb[0].mxu0
    %v151 = vpop.f32.mrb[0].mxu0
    %v152 = vpop.f32.mrb[0].mxu0
    %153 = vdwg.mxu0
    %v154 = vmax.f32 %v149, 0.0
    %v155 = vpack.c.bf16 %v154, %v154
    %s156 = scalar_lea.vmem [#allocation5], 64
    %v157 = vld [vmem:[%s156] sm:$0xf]
    %v158 = vld [vmem:[%s156 + $0x4] sm:$0xf]
    %v159 = vld [vmem:[%s156 + $0x8] sm:$0xf]
    %v160 = vld [vmem:[%s156 + $0xc] sm:$0xf]
    %v161 = vld [vmem:[%s156 + $0x10] sm:$0xf]
    %v162 = vld [vmem:[%s156 + $0x14] sm:$0xf]
    %v163 = vld [vmem:[%s156 + $0x18] sm:$0xf]
    %v164 = vld [vmem:[%s156 + $0x1c] sm:$0xf]
    %v165 = vld [vmem:[%s156 + $0x20] sm:$0xf]
    %v166 = vld [vmem:[%s156 + $0x24] sm:$0xf]
    %v167 = vld [vmem:[%s156 + $0x28] sm:$0xf]
    %v168 = vld [vmem:[%s156 + $0x2c] sm:$0xf]
    %v169 = vld [vmem:[%s156 + $0x30] sm:$0xf]
    %v170 = vld [vmem:[%s156 + $0x34] sm:$0xf]
    %v171 = vld [vmem:[%s156 + $0x38] sm:$0xf]
    %v172 = vld [vmem:[%s156 + $0x3c] sm:$0xf]
    %s173 = scalar_lea.vmem %s2, 1
    %v174 = vld [vmem:[%s173] sm:$0x1]
    %v176 = vlaneseq
    %v177 = vshrl.u32 %v176, 7
    %v178 = vsub.s32 0, %v177
    %v179 = vrot.slane %v174, %v178
    %v197 = vunpack.c.l.b16 %v157
    %v198 = vunpack.c.l.b16 %v158
    %v199 = vunpack.c.l.b16 %v159
    %v200 = vunpack.c.l.b16 %v160
    %v201 = vunpack.c.l.b16 %v161
    %v202 = vunpack.c.l.b16 %v162
    %v203 = vunpack.c.l.b16 %v163
    %v204 = vunpack.c.l.b16 %v164
    %v205 = vunpack.c.l.b16 %v165
    %v206 = vunpack.c.l.b16 %v166
    %v207 = vunpack.c.l.b16 %v167
    %v208 = vunpack.c.l.b16 %v168
    %v209 = vunpack.c.l.b16 %v169
    %v210 = vunpack.c.l.b16 %v170
    %v211 = vunpack.c.l.b16 %v171
    %v212 = vunpack.c.l.b16 %v172
    %v213 = vpack.c.b16 %v198, %v197
    %v214 = vpack.c.b16 %v200, %v199
    %v215 = vpack.c.b16 %v202, %v201
    %v216 = vpack.c.b16 %v204, %v203
    %v217 = vpack.c.b16 %v206, %v205
    %v218 = vpack.c.b16 %v208, %v207
    %v219 = vpack.c.b16 %v210, %v209
    %v220 = vpack.c.b16 %v212, %v211
    %229 = vmatprep.subr.bf16.mxu0 0
    %230 = vmatpush1.bf16.msra.mxu0 %v213
    %231 = vmatprep.subr.bf16.mxu0 0
    %232 = vmatpush1.bf16.msra.mxu0 %v214
    %233 = vmatprep.subr.bf16.mxu0 0
    %234 = vmatpush1.bf16.msra.mxu0 %v215
    %235 = vmatprep.subr.bf16.mxu0 0
    %236 = vmatpush1.bf16.msra.mxu0 %v216
    %237 = vmatprep.subr.bf16.mxu0 0
    %238 = vmatpush1.bf16.msra.mxu0 %v217
    %239 = vmatprep.subr.bf16.mxu0 0
    %240 = vmatpush1.bf16.msra.mxu0 %v218
    %241 = vmatprep.subr.bf16.mxu0 0
    %242 = vmatpush1.bf16.msra.mxu0 %v219
    %243 = vmatprep.subr.bf16.mxu0 0
    %244 = vmatpush1.bf16.msra.mxu0 %v220
    %245 = vmatprep.subr.bf16.mxu0 0
    %246 = vmatpush1.bf16.msra.mxu0 0
    %247 = vmatprep.subr.bf16.mxu0 0
    %248 = vmatpush1.bf16.msra.mxu0 0
    %249 = vmatprep.subr.bf16.mxu0 0
    %250 = vmatpush1.bf16.msra.mxu0 0
    %251 = vmatprep.subr.bf16.mxu0 0
    %252 = vmatpush1.bf16.msra.mxu0 0
    %253 = vmatprep.subr.bf16.mxu0 0
    %254 = vmatpush1.bf16.msra.mxu0 0
    %255 = vmatprep.subr.bf16.mxu0 0
    %256 = vmatpush1.bf16.msra.mxu0 0
    %257 = vmatprep.subr.bf16.mxu0 0
    %258 = vmatpush1.bf16.msra.mxu0 0
    %259 = vmatprep.subr.bf16.mxu0 0
    %260 = vmatpush1.bf16.msra.mxu0 0
    %261 = vmatprep.mubr.bf16.mxu0 0
    %262 = vmatmul.mubr.bf16.gmra.mrb[0].mxu0 %v155
    %v263 = vpop.f32.mrb[0].mxu0
    %v264 = vadd.f32 %v179, %v263
    %v265 = vpop.f32.mrb[0].mxu0
    %v266 = vpop.f32.mrb[0].mxu0
    %v267 = vpop.f32.mrb[0].mxu0
    %268 = vdwg.mxu0
    %v269 = vmax.f32 %v264, 0.0
    %v270 = vpack.c.bf16 %v269, %v269
    %s271 = scalar_lea.vmem [#allocation5], 128
    %v272 = vld [vmem:[%s271] sm:$0xf]
    %v273 = vld [vmem:[%s271 + $0x4] sm:$0xf]
    %v274 = vld [vmem:[%s271 + $0x8] sm:$0xf]
    %v275 = vld [vmem:[%s271 + $0xc] sm:$0xf]
    %v276 = vld [vmem:[%s271 + $0x10] sm:$0xf]
    %v277 = vld [vmem:[%s271 + $0x14] sm:$0xf]
    %v278 = vld [vmem:[%s271 + $0x18] sm:$0xf]
    %v279 = vld [vmem:[%s271 + $0x1c] sm:$0xf]
    %v280 = vld [vmem:[%s271 + $0x20] sm:$0xf]
    %v281 = vld [vmem:[%s271 + $0x24] sm:$0xf]
    %v282 = vld [vmem:[%s271 + $0x28] sm:$0xf]
    %v283 = vld [vmem:[%s271 + $0x2c] sm:$0xf]
    %v284 = vld [vmem:[%s271 + $0x30] sm:$0xf]
    %v285 = vld [vmem:[%s271 + $0x34] sm:$0xf]
    %v286 = vld [vmem:[%s271 + $0x38] sm:$0xf]
    %v287 = vld [vmem:[%s271 + $0x3c] sm:$0xf]
    %s288 = scalar_lea.vmem %s2, 2
    %v289 = vld [vmem:[%s288] sm:$0x1]
    %v291 = vlaneseq
    %v292 = vshrl.u32 %v291, 7
    %v293 = vsub.s32 0, %v292
    %v294 = vrot.slane %v289, %v293
    %v312 = vunpack.c.l.b16 %v272
    %v313 = vunpack.c.l.b16 %v273
    %v314 = vunpack.c.l.b16 %v274
    %v315 = vunpack.c.l.b16 %v275
    %v316 = vunpack.c.l.b16 %v276
    %v317 = vunpack.c.l.b16 %v277
    %v318 = vunpack.c.l.b16 %v278
    %v319 = vunpack.c.l.b16 %v279
    %v320 = vunpack.c.l.b16 %v280
    %v321 = vunpack.c.l.b16 %v281
    %v322 = vunpack.c.l.b16 %v282
    %v323 = vunpack.c.l.b16 %v283
    %v324 = vunpack.c.l.b16 %v284
    %v325 = vunpack.c.l.b16 %v285
    %v326 = vunpack.c.l.b16 %v286
    %v327 = vunpack.c.l.b16 %v287
    %v328 = vpack.c.b16 %v313, %v312
    %v329 = vpack.c.b16 %v315, %v314
    %v330 = vpack.c.b16 %v317, %v316
    %v331 = vpack.c.b16 %v319, %v318
    %v332 = vpack.c.b16 %v321, %v320
    %v333 = vpack.c.b16 %v323, %v322
    %v334 = vpack.c.b16 %v325, %v324
    %v335 = vpack.c.b16 %v327, %v326
    %344 = vmatprep.subr.bf16.mxu0 0
    %345 = vmatpush1.bf16.msra.mxu0 %v328
    %346 = vmatprep.subr.bf16.mxu0 0
    %347 = vmatpush1.bf16.msra.mxu0 %v329
    %348 = vmatprep.subr.bf16.mxu0 0
    %349 = vmatpush1.bf16.msra.mxu0 %v330
    %350 = vmatprep.subr.bf16.mxu0 0
    %351 = vmatpush1.bf16.msra.mxu0 %v331
    %352 = vmatprep.subr.bf16.mxu0 0
    %353 = vmatpush1.bf16.msra.mxu0 %v332
    %354 = vmatprep.subr.bf16.mxu0 0
    %355 = vmatpush1.bf16.msra.mxu0 %v333
    %356 = vmatprep.subr.bf16.mxu0 0
    %357 = vmatpush1.bf16.msra.mxu0 %v334
    %358 = vmatprep.subr.bf16.mxu0 0
    %359 = vmatpush1.bf16.msra.mxu0 %v335
    %360 = vmatprep.subr.bf16.mxu0 0
    %361 = vmatpush1.bf16.msra.mxu0 0
    %362 = vmatprep.subr.bf16.mxu0 0
    %363 = vmatpush1.bf16.msra.mxu0 0
    %364 = vmatprep.subr.bf16.mxu0 0
    %365 = vmatpush1.bf16.msra.mxu0 0
    %366 = vmatprep.subr.bf16.mxu0 0
    %367 = vmatpush1.bf16.msra.mxu0 0
    %368 = vmatprep.subr.bf16.mxu0 0
    %369 = vmatpush1.bf16.msra.mxu0 0
    %370 = vmatprep.subr.bf16.mxu0 0
    %371 = vmatpush1.bf16.msra.mxu0 0
    %372 = vmatprep.subr.bf16.mxu0 0
    %373 = vmatpush1.bf16.msra.mxu0 0
    %374 = vmatprep.subr.bf16.mxu0 0
    %375 = vmatpush1.bf16.msra.mxu0 0
    %376 = vmatprep.mubr.bf16.mxu0 0
    %377 = vmatmul.mubr.bf16.gmra.mrb[0].mxu0 %v270
    %v378 = vpop.f32.mrb[0].mxu0
    %v379 = vadd.f32 %v294, %v378
    %v380 = vpop.f32.mrb[0].mxu0
    %v381 = vpop.f32.mrb[0].mxu0
    %v382 = vpop.f32.mrb[0].mxu0
    %383 = vdwg.mxu0
    %384 = vst [vmem:[#allocation7] sm:$0xff] %v379
    // Predicated region
    $region22: #{tpu_custom_call.1} parent=1 // pred_check
      _
    $region23: #{tpu_custom_call.1} parent=1 // pred_check_branch
      %386 = sbr.rel (0) target = $region25
    $region24: #{tpu_custom_call.1} parent=1 // pred_region
      %s388 = ssub.s32 128, 128
      %389 = vsyncadd [#allocation4], %s388
      %s391 = sshll.u32 [#allocation7], 4
      %s392 = int_to_ptr.vmem [resolvable:$true] %s391
      %394 = dma.vmem_to_hbm [thread:$0]  %s392, 128, %s3, [#allocation4]
    $region25: #{tpu_custom_call.1} parent=1 // pred_fallthru
      _
    // Predicated region
    $region26: #{tpu_custom_call.1} parent=1 // pred_check
      _
    $region27: #{tpu_custom_call.1} parent=1 // pred_check_branch
      %396 = sbr.rel (0) target = $region29
    $region28: #{tpu_custom_call.1} parent=1 // pred_region
      %397 = dma.done [#allocation4], 128
    $region29: #{tpu_custom_call.1} parent=1 // pred_fallthru
      _
    %398 = vsyncpa [#allocation3], 1
    %399 = vsyncpa [#allocation6], 1
    %400 = vsyncpa [#allocation4], 1

</llo_original>
